<compile_context>
chip_gen: v7x
topology: tpu7x:2x2x1
jax: 0.10.0
libtpu: 0.0.40
codegen_flags: <defaults>
</compile_context>

<pallas_src>
import functools

import jax
import jax.numpy as jnp
from jax.experimental import pallas as pl
from jax.experimental.pallas import tpu as pltpu

EPS = 1e-6


def _round_up(x, m):
    return (x + m - 1) // m * m


def patch_embed_kernel(x_ref, w_ref, b_ref, g_ref, beta_ref, o_ref, *, hidden):
    # x_ref:    (TM, Kp)  patch rows (zero-padded beyond true K)
    # w_ref:    (Kp, Np)  projection weight (zero-padded)
    # b_ref:    (1,  Np)  projection bias   (zero-padded)
    # g_ref:    (1,  Np)  layernorm gamma   (zero-padded)
    # beta_ref: (1,  Np)  layernorm beta    (zero-padded)
    # o_ref:    (TM, Np)  embedded + normalized patches
    y = jnp.dot(x_ref[...], w_ref[...], preferred_element_type=jnp.float32)
    y = y + b_ref[...]

    # LayerNorm over the *true* hidden width (padded lanes are zero, but mask
    # anyway so the statistics are exact regardless of padding contents).
    lane = jax.lax.broadcasted_iota(jnp.int32, y.shape, 1)
    valid = lane < hidden
    inv_h = 1.0 / hidden
    mean = jnp.sum(jnp.where(valid, y, 0.0), axis=-1, keepdims=True) * inv_h
    centered = jnp.where(valid, y - mean, 0.0)
    var = jnp.sum(centered * centered, axis=-1, keepdims=True) * inv_h
    y_norm = centered * jax.lax.rsqrt(var + EPS)
    o_ref[...] = (y_norm * g_ref[...] + beta_ref[...]).astype(o_ref.dtype)


@functools.partial(jax.jit, static_argnames=("patch", "tm", "use_bf16"))
def patch_embedding_pretrained(x, conv_w, conv_b, ln_g, ln_b, *, patch,
                               tm=256, use_bf16=False):
    """x: (B, C, H, W) float32, conv_w: (hidden, C, P, P) PyTorch layout."""
    B, C, H, W = x.shape
    hidden = conv_w.shape[0]
    P = patch
    Hp, Wp = H // P, W // P
    K = C * P * P
    M = B * Hp * Wp

    # Lane-dense / MXU-friendly padded sizes.
    Kp = _round_up(K, 128)
    Np = _round_up(hidden, 128)
    tm = max(8, min(tm, _round_up(M, 8)))    # big tiles, but not bigger than M
    Mp = _round_up(M, tm)                    # grid covers every row (no drop)

    # im2col patchify (glue, plain JAX): (B,C,H,W) -> (M, C*P*P), PyTorch
    # (C, kh, kw) flattening order to match conv_w.reshape(hidden, -1).
    xp = x.reshape(B, C, Hp, P, Wp, P)
    xp = jnp.transpose(xp, (0, 2, 4, 1, 3, 5)).reshape(M, K)
    xp = jnp.pad(xp, ((0, Mp - M), (0, Kp - K)))

    w_mat = jnp.pad(conv_w.reshape(hidden, K).T,
                    ((0, Kp - K), (0, Np - hidden)))          # (Kp, Np)
    b_row = jnp.pad(conv_b.reshape(1, hidden), ((0, 0), (0, Np - hidden)))
    g_row = jnp.pad(ln_g.reshape(1, hidden), ((0, 0), (0, Np - hidden)))
    beta_row = jnp.pad(ln_b.reshape(1, hidden), ((0, 0), (0, Np - hidden)))

    if use_bf16:
        # bf16 MXU inputs (v6e/v7x win); accumulation & LN stay f32.
        xp = xp.astype(jnp.bfloat16)
        w_mat = w_mat.astype(jnp.bfloat16)

    in_bytes = (Mp * Kp * xp.dtype.itemsize
                + Kp * Np * w_mat.dtype.itemsize
                + 3 * Np * 4)
    out_bytes = Mp * Np * 4
    cost = pl.CostEstimate(flops=2 * Mp * Kp * Np,
                           transcendentals=0,
                           bytes_accessed=in_bytes + out_bytes)

    grid = (Mp // tm,)
    out = pl.pallas_call(
        functools.partial(patch_embed_kernel, hidden=hidden),
        out_shape=jax.ShapeDtypeStruct((Mp, Np), jnp.float32),
        grid_spec=pltpu.PrefetchScalarGridSpec(
            num_scalar_prefetch=0,
            grid=grid,
            in_specs=[
                pl.BlockSpec((tm, Kp), lambda i: (i, 0)),
                pl.BlockSpec((Kp, Np), lambda i: (0, 0)),   # weight resident
                pl.BlockSpec((1, Np), lambda i: (0, 0)),
                pl.BlockSpec((1, Np), lambda i: (0, 0)),
                pl.BlockSpec((1, Np), lambda i: (0, 0)),
            ],
            out_specs=pl.BlockSpec((tm, Np), lambda i: (i, 0)),
        ),
        compiler_params=pltpu.CompilerParams(
            dimension_semantics=("parallel",)),
        cost_estimate=cost,
    )(xp, w_mat, b_row, g_row, beta_row)

    # Strip padding, then reshape to the HuggingFace ConvNextModel
    # last_hidden_state convention (B, hidden, Hp, Wp).
    # TODO(synk): the NCHW transpose is an extra HBM pass; drop it if the
    #             downstream consumer can take (B, Hp, Wp, hidden).
    out = out[:M, :hidden].reshape(B, Hp, Wp, hidden)
    out = jnp.transpose(out, (0, 3, 1, 2))
    return out


def reference(x, conv_w, conv_b, ln_g, ln_b, patch):
    """Pure-JAX reference: patchify conv + channel-wise layernorm."""
    y = jax.lax.conv_general_dilated(
        x, conv_w, window_strides=(patch, patch), padding="VALID",
        dimension_numbers=("NCHW", "OIHW", "NCHW"))
    y = y + conv_b.reshape(1, -1, 1, 1)
    mean = jnp.mean(y, axis=1, keepdims=True)
    var = jnp.mean((y - mean) ** 2, axis=1, keepdims=True)
    y = (y - mean) * jax.lax.rsqrt(var + EPS)
    return y * ln_g.reshape(1, -1, 1, 1) + ln_b.reshape(1, -1, 1, 1)


if __name__ == "__main__":
    B, C, H, W = 2, 4, 16, 16
    P = 4          # patch size / conv stride
    HIDDEN = 32    # embedding dim

    key = jax.random.PRNGKey(0)
    kx, kw, kb, kg, kbeta = jax.random.split(key, 5)
    x = jax.random.normal(kx, (B, C, H, W), dtype=jnp.float32)
    conv_w = jax.random.normal(kw, (HIDDEN, C, P, P), dtype=jnp.float32) * 0.05
    conv_b = jax.random.normal(kb, (HIDDEN,), dtype=jnp.float32) * 0.01
    ln_g = 1.0 + 0.1 * jax.random.normal(kg, (HIDDEN,), dtype=jnp.float32)
    ln_b = 0.1 * jax.random.normal(kbeta, (HIDDEN,), dtype=jnp.float32)

    ref = reference(x, conv_w, conv_b, ln_g, ln_b, P)

    # f32 path (v5e-friendly, tight tolerance).
    out = patch_embedding_pretrained(x, conv_w, conv_b, ln_g, ln_b, patch=P)
    out = jax.block_until_ready(out)
    assert out.shape == (B, HIDDEN, H // P, W // P), out.shape
    assert jnp.allclose(out, ref, atol=1e-4, rtol=1e-4), float(
        jnp.max(jnp.abs(out - ref)))

    # bf16-input path (v6e/v7x fast path, looser tolerance).
    out_bf16 = patch_embedding_pretrained(
        x, conv_w, conv_b, ln_g, ln_b, patch=P, use_bf16=True)
    out_bf16 = jax.block_until_ready(out_bf16)
    assert jnp.allclose(out_bf16, ref, atol=5e-2, rtol=5e-2), float(
        jnp.max(jnp.abs(out_bf16 - ref)))

    print("KERNEL_OK")
</pallas_src>

<mosaic_0001>
module attributes {stable_mosaic.version = 11 : i64} {
  func.func @patch_embed_kernel(%arg0: i32, %arg1: memref<32x128xf32, #tpu.memory_space<vmem>>, %arg2: memref<128x128xf32, #tpu.memory_space<vmem>>, %arg3: memref<1x128xf32, #tpu.memory_space<vmem>>, %arg4: memref<1x128xf32, #tpu.memory_space<vmem>>, %arg5: memref<1x128xf32, #tpu.memory_space<vmem>>, %arg6: memref<32x128xf32, #tpu.memory_space<vmem>>) attributes {dimension_semantics = [#tpu.dimension_semantics<parallel>], iteration_bounds = array<i64: 1>, scalar_prefetch = 0 : i64, scratch_operands = 0 : i64, tpu.core_type = #tpu.core_type<tc>, window_params = [{transform_indices = @transform_0, window_bounds = array<i64: 32, 128>}, {pipeline_mode = #tpu.pipeline_mode<synchronous>, transform_indices = @transform_1, window_bounds = array<i64: 128, 128>}, {pipeline_mode = #tpu.pipeline_mode<synchronous>, transform_indices = @transform_2, window_bounds = array<i64: 1, 128>}, {pipeline_mode = #tpu.pipeline_mode<synchronous>, transform_indices = @transform_3, window_bounds = array<i64: 1, 128>}, {pipeline_mode = #tpu.pipeline_mode<synchronous>, transform_indices = @transform_4, window_bounds = array<i64: 1, 128>}, {transform_indices = @transform_5, window_bounds = array<i64: 32, 128>}]} {
    %c0 = arith.constant 0 : index
    %c0_0 = arith.constant 0 : index
    %0 = vector.load %arg1[%c0, %c0_0] : memref<32x128xf32, #tpu.memory_space<vmem>>, vector<32x128xf32>
    %c0_1 = arith.constant 0 : index
    %c0_2 = arith.constant 0 : index
    %1 = vector.load %arg2[%c0_1, %c0_2] : memref<128x128xf32, #tpu.memory_space<vmem>>, vector<128x128xf32>
    %cst = arith.constant dense<0.000000e+00> : vector<32x128xf32>
    %2 = tpu.matmul %0, %1, %cst {dimension_numbers = #tpu.dot_dimension_numbers<[1], [0], [0], [1], [0, 0, 1, 1], [], []>} : vector<32x128xf32>, vector<128x128xf32>, vector<32x128xf32> -> vector<32x128xf32>
    %c0_3 = arith.constant 0 : index
    %c0_4 = arith.constant 0 : index
    %3 = vector.load %arg3[%c0_3, %c0_4] : memref<1x128xf32, #tpu.memory_space<vmem>>, vector<1x128xf32>
    %4 = vector.broadcast %3 : vector<1x128xf32> to vector<32x128xf32>
    %5 = arith.addf %2, %4 : vector<32x128xf32>
    %6 = tpu.iota {dimensions = array<i32: 1>} : vector<32x128xi32>
    %c32_i32 = arith.constant 32 : i32
    %7 = vector.broadcast %c32_i32 : i32 to vector<32x128xi32>
    %8 = arith.cmpi slt, %6, %7 : vector<32x128xi32>
    %cst_5 = arith.constant 0.000000e+00 : f32
    %9 = vector.broadcast %cst_5 : f32 to vector<32x128xf32>
    %10 = arith.select %8, %5, %9 : vector<32x128xi1>, vector<32x128xf32>
    %cst_6 = arith.constant dense<0.000000e+00> : vector<32xf32>
    %11 = vector.multi_reduction <add>, %10, %cst_6 [1] : vector<32x128xf32> to vector<32xf32>
    %12 = vector.shape_cast %11 : vector<32xf32> to vector<32x1xf32>
    %cst_7 = arith.constant 3.125000e-02 : f32
    %13 = vector.broadcast %cst_7 : f32 to vector<32x1xf32>
    %14 = arith.mulf %12, %13 : vector<32x1xf32>
    %15 = vector.broadcast %14 : vector<32x1xf32> to vector<32x128xf32>
    %16 = arith.subf %5, %15 : vector<32x128xf32>
    %cst_8 = arith.constant 0.000000e+00 : f32
    %17 = vector.broadcast %cst_8 : f32 to vector<32x128xf32>
    %18 = arith.select %8, %16, %17 : vector<32x128xi1>, vector<32x128xf32>
    %19 = arith.mulf %18, %18 : vector<32x128xf32>
    %cst_9 = arith.constant dense<0.000000e+00> : vector<32xf32>
    %20 = vector.multi_reduction <add>, %19, %cst_9 [1] : vector<32x128xf32> to vector<32xf32>
    %21 = vector.shape_cast %20 : vector<32xf32> to vector<32x1xf32>
    %cst_10 = arith.constant 3.125000e-02 : f32
    %22 = vector.broadcast %cst_10 : f32 to vector<32x1xf32>
    %23 = arith.mulf %21, %22 : vector<32x1xf32>
    %cst_11 = arith.constant 9.99999997E-7 : f32
    %24 = vector.broadcast %cst_11 : f32 to vector<32x1xf32>
    %25 = arith.addf %23, %24 : vector<32x1xf32>
    %26 = math.rsqrt %25 : vector<32x1xf32>
    %27 = vector.broadcast %26 : vector<32x1xf32> to vector<32x128xf32>
    %28 = arith.mulf %18, %27 : vector<32x128xf32>
    %c0_12 = arith.constant 0 : index
    %c0_13 = arith.constant 0 : index
    %29 = vector.load %arg4[%c0_12, %c0_13] : memref<1x128xf32, #tpu.memory_space<vmem>>, vector<1x128xf32>
    %30 = vector.broadcast %29 : vector<1x128xf32> to vector<32x128xf32>
    %31 = arith.mulf %28, %30 : vector<32x128xf32>
    %c0_14 = arith.constant 0 : index
    %c0_15 = arith.constant 0 : index
    %32 = vector.load %arg5[%c0_14, %c0_15] : memref<1x128xf32, #tpu.memory_space<vmem>>, vector<1x128xf32>
    %33 = vector.broadcast %32 : vector<1x128xf32> to vector<32x128xf32>
    %34 = arith.addf %31, %33 : vector<32x128xf32>
    %c0_16 = arith.constant 0 : index
    %c0_17 = arith.constant 0 : index
    %35 = vector.load %arg6[%c0_16, %c0_17] : memref<32x128xf32, #tpu.memory_space<vmem>>, vector<32x128xf32>
    tpu.vector_store %arg6[%c0_16, %c0_17], %34 {strides = array<i32>} : memref<32x128xf32, #tpu.memory_space<vmem>>, vector<32x128xf32>,
    return
  }
  func.func @transform_0(%arg0: i32) -> (i32, i32) {
    %c0_i32 = arith.constant 0 : i32
    %c0_i32_0 = arith.constant 0 : i32
    return %arg0, %c0_i32 : i32, i32
  }
  func.func @transform_1(%arg0: i32) -> (i32, i32) {
    %c0_i32 = arith.constant 0 : i32
    %c0_i32_0 = arith.constant 0 : i32
    %c0_i32_1 = arith.constant 0 : i32
    return %c0_i32, %c0_i32_0 : i32, i32
  }
  func.func @transform_2(%arg0: i32) -> (i32, i32) {
    %c0_i32 = arith.constant 0 : i32
    %c0_i32_0 = arith.constant 0 : i32
    %c0_i32_1 = arith.constant 0 : i32
    return %c0_i32, %c0_i32_0 : i32, i32
  }
  func.func @transform_3(%arg0: i32) -> (i32, i32) {
    %c0_i32 = arith.constant 0 : i32
    %c0_i32_0 = arith.constant 0 : i32
    %c0_i32_1 = arith.constant 0 : i32
    return %c0_i32, %c0_i32_0 : i32, i32
  }
  func.func @transform_4(%arg0: i32) -> (i32, i32) {
    %c0_i32 = arith.constant 0 : i32
    %c0_i32_0 = arith.constant 0 : i32
    %c0_i32_1 = arith.constant 0 : i32
    return %c0_i32, %c0_i32_0 : i32, i32
  }
  func.func @transform_5(%arg0: i32) -> (i32, i32) {
    %c0_i32 = arith.constant 0 : i32
    %c0_i32_0 = arith.constant 0 : i32
    return %arg0, %c0_i32 : i32, i32
  }
}

</mosaic_0001>

<llo_original>
// kernel: patch_embedding_pretrained.1
$region0: #{patch_embedding_pretrained.1}
  #allocation0 [shape = 'u32[]', space=smem, size = 0x4, offset = 0x4, fixed_abs, tag = 'smem constant byte address 0x4 - core index']
  #allocation1 [shape = 'u32[144,128]{1,0:T(1,128)}', space=vmem, size = 0x12000, scoped, tag = 'internal scratch']
  %s0 = inlined_call_operand.vmem [shape: f32[32,128], index: 0, kind: input, shape index: {}]
  %s1 = inlined_call_operand.vmem [shape: f32[128,128], index: 1, kind: input, shape index: {}]
  %s2 = inlined_call_operand.vmem [shape: f32[1,128], index: 2, kind: input, shape index: {}]
  %s3 = inlined_call_operand.vmem [shape: f32[1,128], index: 3, kind: input, shape index: {}]
  %s4 = inlined_call_operand.vmem [shape: f32[1,128], index: 4, kind: input, shape index: {}]
  %s5 = inlined_call_operand.hbm [shape: f32[32,128], index: 5, kind: output, shape index: {}]
  %s6 = sld [smem:[#allocation0]]
  $region30: #{patch_embedding_pretrained.1} parent=0
    _
  %s8 = ssub.s32 1, %s6
  %s9 = scalar_select 0, %s8, %s6
  $region1: #{patch_embedding_pretrained.1} parent=0
    #allocation2 [shape = 'u8[16384]{0}', space=vmem, size = 0x4000, scoped, tag = 'output window, operand 0, single buffered']
    #allocation3 [shape = 's32[1]{0}', space=sflag, size = 0x4, scoped, tag = 'scoped memory for patch_embedding_pretrained.1']
    %10 = vsyncpa [#allocation3], 0
    // Predicated region
    $region2: #{patch_embedding_pretrained.1} parent=1 // pred_check
      _
    $region3: #{patch_embedding_pretrained.1} parent=1 // pred_check_branch
      %12 = sbr.rel (0) target = $region5
    $region4: #{patch_embedding_pretrained.1} parent=1 // pred_region
      _
    $region5: #{patch_embedding_pretrained.1} parent=1 // pred_fallthru
      _
    // Predicated region
    $region6: #{patch_embedding_pretrained.1} parent=1 // pred_check
      _
    $region7: #{patch_embedding_pretrained.1} parent=1 // pred_check_branch
      %14 = sbr.rel (0) target = $region9
    $region8: #{patch_embedding_pretrained.1} parent=1 // pred_region
      _
    $region9: #{patch_embedding_pretrained.1} parent=1 // pred_fallthru
      _
    // Predicated region
    $region10: #{patch_embedding_pretrained.1} parent=1 // pred_check
      _
    $region11: #{patch_embedding_pretrained.1} parent=1 // pred_check_branch
      %16 = sbr.rel (0) target = $region13
    $region12: #{patch_embedding_pretrained.1} parent=1 // pred_region
      _
    $region13: #{patch_embedding_pretrained.1} parent=1 // pred_fallthru
      _
    // Predicated region
    $region14: #{patch_embedding_pretrained.1} parent=1 // pred_check
      _
    $region15: #{patch_embedding_pretrained.1} parent=1 // pred_check_branch
      %18 = sbr.rel (0) target = $region17
    $region16: #{patch_embedding_pretrained.1} parent=1 // pred_region
      _
    $region17: #{patch_embedding_pretrained.1} parent=1 // pred_fallthru
      _
    // Predicated region
    $region18: #{patch_embedding_pretrained.1} parent=1 // pred_check
      _
    $region19: #{patch_embedding_pretrained.1} parent=1 // pred_check_branch
      %20 = sbr.rel (0) target = $region21
    $region20: #{patch_embedding_pretrained.1} parent=1 // pred_region
      _
    $region21: #{patch_embedding_pretrained.1} parent=1 // pred_fallthru
      _
    %v21 = vld [vmem:[%s0] sm:$0xff]
    %v22 = vld [vmem:[%s0 + $0x8] sm:$0xff]
    %v23 = vld [vmem:[%s0 + $0x10] sm:$0xff]
    %v24 = vld [vmem:[%s0 + $0x18] sm:$0xff]
    %v25 = vld [vmem:[%s1] sm:$0xff]
    %v26 = vld [vmem:[%s1 + $0x8] sm:$0xff]
    %v27 = vld [vmem:[%s1 + $0x10] sm:$0xff]
    %v28 = vld [vmem:[%s1 + $0x18] sm:$0xff]
    %v29 = vld [vmem:[%s1 + $0x20] sm:$0xff]
    %v30 = vld [vmem:[%s1 + $0x28] sm:$0xff]
    %v31 = vld [vmem:[%s1 + $0x30] sm:$0xff]
    %v32 = vld [vmem:[%s1 + $0x38] sm:$0xff]
    %v33 = vld [vmem:[%s1 + $0x40] sm:$0xff]
    %v34 = vld [vmem:[%s1 + $0x48] sm:$0xff]
    %v35 = vld [vmem:[%s1 + $0x50] sm:$0xff]
    %v36 = vld [vmem:[%s1 + $0x58] sm:$0xff]
    %v37 = vld [vmem:[%s1 + $0x60] sm:$0xff]
    %v38 = vld [vmem:[%s1 + $0x68] sm:$0xff]
    %v39 = vld [vmem:[%s1 + $0x70] sm:$0xff]
    %v40 = vld [vmem:[%s1 + $0x78] sm:$0xff]
    %v41 = vld [vmem:[%s2] sm:$0x1]
    %v43 = vlaneseq
    %v44 = vshrl.u32 %v43, 7
    %v45 = vsub.s32 0, %v44
    %v46 = vrot.slane %v41, %v45
    %48 = vmatprep.subr.mxu0 0.0
    %49 = vmatpush1.msra.mxu0 %v25
    %50 = vmatprep.subr.mxu0 0.0
    %51 = vmatpush1.msra.mxu0 %v26
    %52 = vmatprep.subr.mxu0 0.0
    %53 = vmatpush1.msra.mxu0 %v27
    %54 = vmatprep.subr.mxu0 0.0
    %55 = vmatpush1.msra.mxu0 %v28
    %56 = vmatprep.subr.mxu0 0.0
    %57 = vmatpush1.msra.mxu0 %v29
    %58 = vmatprep.subr.mxu0 0.0
    %59 = vmatpush1.msra.mxu0 %v30
    %60 = vmatprep.subr.mxu0 0.0
    %61 = vmatpush1.msra.mxu0 %v31
    %62 = vmatprep.subr.mxu0 0.0
    %63 = vmatpush1.msra.mxu0 %v32
    %64 = vmatprep.subr.mxu0 0.0
    %65 = vmatpush1.msra.mxu0 %v33
    %66 = vmatprep.subr.mxu0 0.0
    %67 = vmatpush1.msra.mxu0 %v34
    %68 = vmatprep.subr.mxu0 0.0
    %69 = vmatpush1.msra.mxu0 %v35
    %70 = vmatprep.subr.mxu0 0.0
    %71 = vmatpush1.msra.mxu0 %v36
    %72 = vmatprep.subr.mxu0 0.0
    %73 = vmatpush1.msra.mxu0 %v37
    %74 = vmatprep.subr.mxu0 0.0
    %75 = vmatpush1.msra.mxu0 %v38
    %76 = vmatprep.subr.mxu0 0.0
    %77 = vmatpush1.msra.mxu0 %v39
    %78 = vmatprep.subr.mxu0 0.0
    %79 = vmatpush1.msra.mxu0 %v40
    %80 = vmatprep.subr.mxu0 0.0
    %81 = vmatpush1.msra.mxu0 0.0
    %82 = vmatprep.subr.mxu0 0.0
    %83 = vmatpush1.msra.mxu0 0.0
    %84 = vmatprep.subr.mxu0 0.0
    %85 = vmatpush1.msra.mxu0 0.0
    %86 = vmatprep.subr.mxu0 0.0
    %87 = vmatpush1.msra.mxu0 0.0
    %88 = vmatprep.subr.mxu0 0.0
    %89 = vmatpush1.msra.mxu0 0.0
    %90 = vmatprep.subr.mxu0 0.0
    %91 = vmatpush1.msra.mxu0 0.0
    %92 = vmatprep.subr.mxu0 0.0
    %93 = vmatpush1.msra.mxu0 0.0
    %94 = vmatprep.subr.mxu0 0.0
    %95 = vmatpush1.msra.mxu0 0.0
    %96 = vmatprep.subr.mxu0 0.0
    %97 = vmatpush1.msra.mxu0 0.0
    %98 = vmatprep.subr.mxu0 0.0
    %99 = vmatpush1.msra.mxu0 0.0
    %100 = vmatprep.subr.mxu0 0.0
    %101 = vmatpush1.msra.mxu0 0.0
    %102 = vmatprep.subr.mxu0 0.0
    %103 = vmatpush1.msra.mxu0 0.0
    %104 = vmatprep.subr.mxu0 0.0
    %105 = vmatpush1.msra.mxu0 0.0
    %106 = vmatprep.subr.mxu0 0.0
    %107 = vmatpush1.msra.mxu0 0.0
    %108 = vmatprep.subr.mxu0 0.0
    %109 = vmatpush1.msra.mxu0 0.0
    %110 = vmatprep.subr.mxu0 0.0
    %111 = vmatpush1.msra.mxu0 0.0
    %112 = vmatprep.mubr.f32.mxu0 0.0
    %113 = vmatmul.mubr.f32.gmra.mrb[0].mxu0 %v21
    %v114 = vpop.f32.mrb[0].mxu0
    %v115 = vadd.f32 %v46, %v114
    %v116 = vpop.f32.mrb[0].mxu0
    %117 = vmatprep.mubr.f32.mxu0 0.0
    %118 = vmatmul.mubr.f32.gmra.mrb[0].mxu0 %v22
    %v119 = vpop.f32.mrb[0].mxu0
    %v120 = vadd.f32 %v46, %v119
    %v121 = vpop.f32.mrb[0].mxu0
    %122 = vmatprep.mubr.f32.mxu0 0.0
    %123 = vmatmul.mubr.f32.gmra.mrb[0].mxu0 %v23
    %v124 = vpop.f32.mrb[0].mxu0
    %v125 = vadd.f32 %v46, %v124
    %v126 = vpop.f32.mrb[0].mxu0
    %127 = vmatprep.mubr.f32.mxu0 0.0
    %128 = vmatmul.mubr.f32.gmra.mrb[0].mxu0 %v24
    %v129 = vpop.f32.mrb[0].mxu0
    %v130 = vadd.f32 %v46, %v129
    %v131 = vpop.f32.mrb[0].mxu0
    %132 = vdwg.mxu0
    %v133 = vlaneseq
    %v134 = vand.u32 %v133, 127
    %vm135 = vcmp.lt.s32.totalorder %v134, 32
    %v136 = vsel %vm135, %v115, 0.0
    %v137 = vsel %vm135, %v120, 0.0
    %v138 = vsel %vm135, %v125, 0.0
    %v139 = vsel %vm135, %v130, 0.0
    %140 = vadd.xlane.f32.xlu0 %v136
    %v141 = vpop.xlane.xlu0 %140
    %142 = vadd.xlane.f32.xlu0 %v137
    %v143 = vpop.xlane.xlu0 %142
    %144 = vadd.xlane.f32.xlu0 %v138
    %v145 = vpop.xlane.xlu0 %144
    %146 = vadd.xlane.f32.xlu0 %v139
    %v147 = vpop.xlane.xlu0 %146
    %v148 = vmul.f32 %v141, 0.03125
    %v149 = vmul.f32 %v143, 0.03125
    %v150 = vmul.f32 %v145, 0.03125
    %v151 = vmul.f32 %v147, 0.03125
    %v152 = vsub.f32 %v115, %v148
    %v153 = vsub.f32 %v120, %v149
    %v154 = vsub.f32 %v125, %v150
    %v155 = vsub.f32 %v130, %v151
    %v156 = vsel %vm135, %v152, 0.0
    %v157 = vsel %vm135, %v153, 0.0
    %v158 = vsel %vm135, %v154, 0.0
    %v159 = vsel %vm135, %v155, 0.0
    %v160 = vmul.f32 %v156, %v156
    %v161 = vmul.f32 %v157, %v157
    %v162 = vmul.f32 %v158, %v158
    %v163 = vmul.f32 %v159, %v159
    %164 = vadd.xlane.f32.xlu0 %v160
    %v165 = vpop.xlane.xlu0 %164
    %166 = vadd.xlane.f32.xlu0 %v161
    %v167 = vpop.xlane.xlu0 %166
    %168 = vadd.xlane.f32.xlu0 %v162
    %v169 = vpop.xlane.xlu0 %168
    %170 = vadd.xlane.f32.xlu0 %v163
    %v171 = vpop.xlane.xlu0 %170
    %v172 = vmul.f32 %v165, 0.03125
    %v173 = vmul.f32 %v167, 0.03125
    %v174 = vmul.f32 %v169, 0.03125
    %v175 = vmul.f32 %v171, 0.03125
    %v176 = vadd.f32 %v172, 1e-06
    %v177 = vadd.f32 %v173, 1e-06
    %v178 = vadd.f32 %v174, 1e-06
    %v179 = vadd.f32 %v175, 1e-06
    %v180 = vrsqrt.pop %v176
    %v181 = vrsqrt.pop %v177
    %v182 = vrsqrt.pop %v178
    %v183 = vrsqrt.pop %v179
    %v184 = vmul.f32 %v156, %v180
    %v185 = vmul.f32 %v157, %v181
    %v186 = vmul.f32 %v158, %v182
    %v187 = vmul.f32 %v159, %v183
    %v188 = vld [vmem:[%s3] sm:$0x1]
    %v190 = vlaneseq
    %v191 = vshrl.u32 %v190, 7
    %v192 = vsub.s32 0, %v191
    %v193 = vrot.slane %v188, %v192
    %v195 = vmul.f32 %v184, %v193
    %v196 = vmul.f32 %v185, %v193
    %v197 = vmul.f32 %v186, %v193
    %v198 = vmul.f32 %v187, %v193
    %v199 = vld [vmem:[%s4] sm:$0x1]
    %v201 = vlaneseq
    %v202 = vshrl.u32 %v201, 7
    %v203 = vsub.s32 0, %v202
    %v204 = vrot.slane %v199, %v203
    %v206 = vadd.f32 %v195, %v204
    %v207 = vadd.f32 %v196, %v204
    %v208 = vadd.f32 %v197, %v204
    %v209 = vadd.f32 %v198, %v204
    %210 = vst [vmem:[#allocation2] sm:$0xff] %v206
    %211 = vst [vmem:[#allocation2 + $0x8] sm:$0xff] %v207
    %212 = vst [vmem:[#allocation2 + $0x10] sm:$0xff] %v208
    %213 = vst [vmem:[#allocation2 + $0x18] sm:$0xff] %v209
    // Predicated region
    $region22: #{patch_embedding_pretrained.1} parent=1 // pred_check
      _
    $region23: #{patch_embedding_pretrained.1} parent=1 // pred_check_branch
      %215 = sbr.rel (0) target = $region25
    $region24: #{patch_embedding_pretrained.1} parent=1 // pred_region
      %s217 = ssub.s32 512, 512
      %218 = vsyncadd [#allocation3], %s217
      %s219 = sshll.u32 [#allocation2], 4
      %s220 = int_to_ptr.vmem [resolvable:$true] %s219
      %225 = dma.vmem_to_hbm [thread:$0]  %s220, 512, %s5, [#allocation3], 128, 128, 8
    $region25: #{patch_embedding_pretrained.1} parent=1 // pred_fallthru
      _
    // Predicated region
    $region26: #{patch_embedding_pretrained.1} parent=1 // pred_check
      _
    $region27: #{patch_embedding_pretrained.1} parent=1 // pred_check_branch
      %227 = sbr.rel (0) target = $region29
    $region28: #{patch_embedding_pretrained.1} parent=1 // pred_region
      %228 = dma.done [#allocation3], 512
    $region29: #{patch_embedding_pretrained.1} parent=1 // pred_fallthru
      _
    %229 = vsyncpa [#allocation3], 1

</llo_original>
